<compile_context>
chip_gen: v7x
topology: tpu7x:2x2x1
jax: 0.10.0
libtpu: 0.0.40
codegen_flags: <defaults>
</compile_context>

<pallas_src>
import functools

import jax
import jax.numpy as jnp
from jax.experimental import pallas as pl
from jax.experimental.pallas import tpu as pltpu

_OUT_LANES = 128  # lane-dense partial-sum block width


def _linear_ce_kernel(x_ref, w_ref, b_ref, y_ref, out_ref, *,
                      tile_b, batch_real, mask_rows):
    # ---- Linear: logits = x @ W.T + b  (no in-kernel transpose) -----------
    x = x_ref[...].astype(jnp.bfloat16)          # (TB, Hp)
    w = w_ref[...].astype(jnp.bfloat16)          # (Hp, Hp)   (out, in)
    logits = jax.lax.dot_general(
        x, w,
        dimension_numbers=(((1,), (1,)), ((), ())),   # contract in-features
        preferred_element_type=jnp.float32,
    ) + b_ref[...].astype(jnp.float32)           # (TB, Hp) f32

    tb, hp = logits.shape

    # ---- Cross-entropy (stable; shifted logits reused for both terms) -----
    m = jnp.max(logits, axis=-1, keepdims=True)                  # (TB, 1)
    shift = logits - m                                           # (TB, Hp)
    sumexp = jnp.sum(jnp.exp(shift), axis=-1, keepdims=True)     # (TB, 1)

    cls_idx = jax.lax.broadcasted_iota(jnp.int32, (tb, hp), 1)   # (TB, Hp)
    onehot = (cls_idx == y_ref[...]).astype(jnp.float32)         # (TB, Hp)
    label_shift = jnp.sum(shift * onehot, axis=-1, keepdims=True)

    row_loss = jnp.log(sumexp) - label_shift                     # (TB, 1)

    if mask_rows:  # static: only emitted when the batch was actually padded
        row_ids = (pl.program_id(0) * tile_b
                   + jax.lax.broadcasted_iota(jnp.int32, (tb, 1), 0))
        row_loss = jnp.where(row_ids < batch_real, row_loss, 0.0)

    # Per-tile partial sum, replicated across a full 128-lane block so the HBM
    # store is always an unmasked, lane-dense vst (even when TB < 128).
    partial = jnp.sum(row_loss, axis=0, keepdims=True)           # (1, 1)
    out_ref[...] = jnp.broadcast_to(partial.reshape(1, 1, 1),
                                    (1, 1, _OUT_LANES))


def _round_up(a, b):
    return (a + b - 1) // b * b


def simple_model_loss(x, weight, bias, y, *, block_batch=128):
    """Mean cross-entropy of (x @ weight.T + bias) vs integer labels y.

    x: (B, H), weight: (H, H) in PyTorch (out, in) layout, bias: (H,), y: (B,).
    block_batch: batch tile size; >=128 fills the MXU (use 256 on v6e/v7x).
    """
    B, H = x.shape

    Hp = _round_up(H, 128)                    # lane-dense class / feature dim
    TB = min(block_batch, _round_up(B, 8))    # batch tile
    Bp = _round_up(B, TB)
    n_tiles = Bp // TB

    # --- wrapper-side padding (skipped entirely when shapes already align) --
    if (Bp, Hp) != (B, H):
        xp = jnp.zeros((Bp, Hp), x.dtype).at[:B, :H].set(x)
    else:
        xp = x
    if Hp != H:
        wp = jnp.zeros((Hp, Hp), weight.dtype).at[:H, :H].set(weight)
        # Padded classes get a huge negative bias so exp() underflows to 0 and
        # they never affect max / logsumexp or the one-hot sum.
        bp = jnp.full((1, Hp), -1e9, jnp.float32).at[0, :H].set(
            bias.astype(jnp.float32))
    else:
        wp = weight
        bp = bias.reshape(1, H).astype(jnp.float32)
    if Bp != B:
        yp = jnp.zeros((Bp, 1), jnp.int32).at[:B, 0].set(y.astype(jnp.int32))
    else:
        yp = y.reshape(B, 1).astype(jnp.int32)

    # TODO(synk): for very large H the resident (Hp, Hp) weight exceeds the
    # VMEM budget (esp. v7x's 64 MiB); that case needs N/K tiling with the K
    # axis last and marked "arbitrary".
    out = pl.pallas_call(
        functools.partial(_linear_ce_kernel, tile_b=TB, batch_real=B,
                          mask_rows=(Bp != B)),
        out_shape=jax.ShapeDtypeStruct((n_tiles, 1, _OUT_LANES), jnp.float32),
        grid=(n_tiles,),
        in_specs=[
            pl.BlockSpec((TB, Hp), lambda i: (i, 0)),   # x: streamed per tile
            pl.BlockSpec((Hp, Hp), lambda i: (0, 0)),   # weight: VMEM-resident
            pl.BlockSpec((1, Hp), lambda i: (0, 0)),    # bias:   VMEM-resident
            pl.BlockSpec((TB, 1), lambda i: (i, 0)),    # labels: streamed
        ],
        out_specs=pl.BlockSpec((1, 1, _OUT_LANES), lambda i: (i, 0, 0)),
        compiler_params=pltpu.CompilerParams(
            dimension_semantics=("parallel",)),         # per-tile partials
    )(xp, wp, bp, yp)

    # out[i, 0, :] = tile i's loss sum replicated across lanes.
    return jnp.sum(out[:, 0, 0]) / B


if __name__ == "__main__":
    batch = 8
    hidden_dim = 32

    key = jax.random.PRNGKey(0)
    kx, kw, kb, ky = jax.random.split(key, 4)

    # Deterministic parameter init (mimics torch.nn.Linear uniform init range).
    bound = 1.0 / (hidden_dim ** 0.5)
    weight = jax.random.uniform(kw, (hidden_dim, hidden_dim),
                                minval=-bound, maxval=bound, dtype=jnp.float32)
    bias = jax.random.uniform(kb, (hidden_dim,),
                              minval=-bound, maxval=bound, dtype=jnp.float32)

    x = jax.random.normal(kx, (batch, hidden_dim), dtype=jnp.float32)
    y = jax.random.randint(ky, (batch,), 0, hidden_dim, dtype=jnp.int32)

    loss = simple_model_loss(x, weight, bias, y)
    jax.block_until_ready(loss)

    # Pure-JAX reference with the same bf16-matmul / f32-accumulate numerics.
    logits_ref = jax.lax.dot_general(
        x.astype(jnp.bfloat16), weight.astype(jnp.bfloat16),
        dimension_numbers=(((1,), (1,)), ((), ())),
        preferred_element_type=jnp.float32) + bias
    logp = jax.nn.log_softmax(logits_ref, axis=-1)
    ref = -jnp.mean(logp[jnp.arange(batch), y])
    assert jnp.allclose(loss, ref, atol=1e-4, rtol=1e-4), (loss, ref)

    print("KERNEL_OK")
</pallas_src>

<mosaic_0001>
module attributes {stable_mosaic.version = 11 : i64} {
  func.func @_linear_ce_kernel(%arg0: i32, %arg1: memref<8x128xf32, #tpu.memory_space<vmem>>, %arg2: memref<128x128xf32, #tpu.memory_space<vmem>>, %arg3: memref<1x128xf32, #tpu.memory_space<vmem>>, %arg4: memref<8x1xi32, #tpu.memory_space<vmem>>, %arg5: memref<1x1x128xf32, #tpu.memory_space<vmem>>) attributes {dimension_semantics = [#tpu.dimension_semantics<parallel>], iteration_bounds = array<i64: 1>, scalar_prefetch = 0 : i64, scratch_operands = 0 : i64, tpu.core_type = #tpu.core_type<tc>, window_params = [{transform_indices = @transform_0, window_bounds = array<i64: 8, 128>}, {pipeline_mode = #tpu.pipeline_mode<synchronous>, transform_indices = @transform_1, window_bounds = array<i64: 128, 128>}, {pipeline_mode = #tpu.pipeline_mode<synchronous>, transform_indices = @transform_2, window_bounds = array<i64: 1, 128>}, {transform_indices = @transform_3, window_bounds = array<i64: 8, 1>}, {transform_indices = @transform_4, window_bounds = array<i64: 1, 1, 128>}]} {
    %c0 = arith.constant 0 : index
    %c0_0 = arith.constant 0 : index
    %0 = vector.load %arg1[%c0, %c0_0] : memref<8x128xf32, #tpu.memory_space<vmem>>, vector<8x128xf32>
    %1 = arith.truncf %0 : vector<8x128xf32> to vector<8x128xbf16>
    %c0_1 = arith.constant 0 : index
    %c0_2 = arith.constant 0 : index
    %2 = vector.load %arg2[%c0_1, %c0_2] : memref<128x128xf32, #tpu.memory_space<vmem>>, vector<128x128xf32>
    %3 = arith.truncf %2 : vector<128x128xf32> to vector<128x128xbf16>
    %cst = arith.constant dense<0.000000e+00> : vector<8x128xf32>
    %4 = tpu.matmul %1, %3, %cst {dimension_numbers = #tpu.dot_dimension_numbers<[1], [1], [0], [0], [0, 0, 1, 0], [], []>} : vector<8x128xbf16>, vector<128x128xbf16>, vector<8x128xf32> -> vector<8x128xf32>
    %c0_3 = arith.constant 0 : index
    %c0_4 = arith.constant 0 : index
    %5 = vector.load %arg3[%c0_3, %c0_4] : memref<1x128xf32, #tpu.memory_space<vmem>>, vector<1x128xf32>
    %6 = vector.broadcast %5 : vector<1x128xf32> to vector<8x128xf32>
    %7 = arith.addf %4, %6 : vector<8x128xf32>
    %cst_5 = arith.constant dense<0xFF800000> : vector<8xf32>
    %8 = vector.multi_reduction <maximumf>, %7, %cst_5 [1] : vector<8x128xf32> to vector<8xf32>
    %9 = vector.shape_cast %8 : vector<8xf32> to vector<8x1xf32>
    %10 = vector.broadcast %9 : vector<8x1xf32> to vector<8x128xf32>
    %11 = arith.subf %7, %10 : vector<8x128xf32>
    %12 = math.exp %11 : vector<8x128xf32>
    %cst_6 = arith.constant dense<0.000000e+00> : vector<8xf32>
    %13 = vector.multi_reduction <add>, %12, %cst_6 [1] : vector<8x128xf32> to vector<8xf32>
    %14 = vector.shape_cast %13 : vector<8xf32> to vector<8x1xf32>
    %15 = tpu.iota {dimensions = array<i32: 1>} : vector<8x128xi32>
    %c0_7 = arith.constant 0 : index
    %c0_8 = arith.constant 0 : index
    %16 = vector.load %arg4[%c0_7, %c0_8] : memref<8x1xi32, #tpu.memory_space<vmem>>, vector<8x1xi32>
    %17 = vector.broadcast %16 : vector<8x1xi32> to vector<8x128xi32>
    %18 = arith.cmpi eq, %15, %17 : vector<8x128xi32>
    %19 = arith.extui %18 : vector<8x128xi1> to vector<8x128xi32>
    %20 = arith.sitofp %19 : vector<8x128xi32> to vector<8x128xf32>
    %21 = arith.mulf %11, %20 : vector<8x128xf32>
    %cst_9 = arith.constant dense<0.000000e+00> : vector<8xf32>
    %22 = vector.multi_reduction <add>, %21, %cst_9 [1] : vector<8x128xf32> to vector<8xf32>
    %23 = vector.shape_cast %22 : vector<8xf32> to vector<8x1xf32>
    %24 = math.log %14 : vector<8x1xf32>
    %25 = arith.subf %24, %23 : vector<8x1xf32>
    %cst_10 = arith.constant dense<0.000000e+00> : vector<1xf32>
    %26 = vector.multi_reduction <add>, %25, %cst_10 [0] : vector<8x1xf32> to vector<1xf32>
    %27 = vector.shape_cast %26 : vector<1xf32> to vector<1x1xf32>
    %28 = vector.shape_cast %27 : vector<1x1xf32> to vector<1x1x1xf32>
    %29 = vector.shape_cast %28 : vector<1x1x1xf32> to vector<1x1x1xf32>
    %30 = vector.broadcast %29 : vector<1x1x1xf32> to vector<1x1x128xf32>
    %c0_11 = arith.constant 0 : index
    %c0_12 = arith.constant 0 : index
    %c0_13 = arith.constant 0 : index
    %31 = vector.load %arg5[%c0_11, %c0_12, %c0_13] : memref<1x1x128xf32, #tpu.memory_space<vmem>>, vector<1x1x128xf32>
    tpu.vector_store %arg5[%c0_11, %c0_12, %c0_13], %30 {strides = array<i32>} : memref<1x1x128xf32, #tpu.memory_space<vmem>>, vector<1x1x128xf32>,
    return
  }
  func.func @transform_0(%arg0: i32) -> (i32, i32) {
    %c0_i32 = arith.constant 0 : i32
    %c0_i32_0 = arith.constant 0 : i32
    return %arg0, %c0_i32 : i32, i32
  }
  func.func @transform_1(%arg0: i32) -> (i32, i32) {
    %c0_i32 = arith.constant 0 : i32
    %c0_i32_0 = arith.constant 0 : i32
    %c0_i32_1 = arith.constant 0 : i32
    return %c0_i32, %c0_i32_0 : i32, i32
  }
  func.func @transform_2(%arg0: i32) -> (i32, i32) {
    %c0_i32 = arith.constant 0 : i32
    %c0_i32_0 = arith.constant 0 : i32
    %c0_i32_1 = arith.constant 0 : i32
    return %c0_i32, %c0_i32_0 : i32, i32
  }
  func.func @transform_3(%arg0: i32) -> (i32, i32) {
    %c0_i32 = arith.constant 0 : i32
    %c0_i32_0 = arith.constant 0 : i32
    return %arg0, %c0_i32 : i32, i32
  }
  func.func @transform_4(%arg0: i32) -> (i32, i32, i32) {
    %c0_i32 = arith.constant 0 : i32
    %c0_i32_0 = arith.constant 0 : i32
    %c0_i32_1 = arith.constant 0 : i32
    return %arg0, %c0_i32, %c0_i32_0 : i32, i32, i32
  }
}

</mosaic_0001>

<llo_original>
// kernel: tpu_custom_call.1
$region0: #{tpu_custom_call.1}
  #allocation0 [shape = 'u32[]', space=smem, size = 0x4, offset = 0x4, fixed_abs, tag = 'smem constant byte address 0x4 - core index']
  #allocation1 [shape = 'u32[144,128]{1,0:T(1,128)}', space=vmem, size = 0x12000, scoped, tag = 'internal scratch']
  %s0 = inlined_call_operand.vmem [shape: f32[8,128], index: 0, kind: input, shape index: {}]
  %s1 = inlined_call_operand.hbm [shape: f32[128,128], index: 1, kind: input, shape index: {}]
  %s2 = inlined_call_operand.vmem [shape: f32[1,128], index: 2, kind: input, shape index: {}]
  %s3 = inlined_call_operand.vmem [shape: s32[8,1], index: 3, kind: input, shape index: {}]
  %s4 = inlined_call_operand.hbm [shape: f32[1,1,128], index: 4, kind: output, shape index: {}]
  %s5 = sld [smem:[#allocation0]]
  $region30: #{tpu_custom_call.1} parent=0
    _
  %s7 = ssub.s32 1, %s5
  %s8 = scalar_select 0, %s7, %s5
  $region1: #{tpu_custom_call.1} parent=0
    #allocation2 [shape = 'u8[65536]{0}', space=vmem, size = 0x10000, scoped, tag = 'input window, operand 1, single buffered']
    #allocation3 [shape = 's32[1]{0}', space=sflag, size = 0x4, scoped, tag = 'scoped memory for tpu_custom_call.1']
    #allocation4 [shape = 's32[1]{0}', space=sflag, size = 0x4, scoped, tag = 'scoped memory for tpu_custom_call.1']
    #allocation5 [shape = 'u8[512]{0}', space=vmem, size = 0x400, scoped, tag = 'output window, operand 0, single buffered']
    %9 = vsyncpa [#allocation3], 0
    %10 = vsyncpa [#allocation4], 0
    // Predicated region
    $region2: #{tpu_custom_call.1} parent=1 // pred_check
      _
    $region3: #{tpu_custom_call.1} parent=1 // pred_check_branch
      %12 = sbr.rel (0) target = $region5
    $region4: #{tpu_custom_call.1} parent=1 // pred_region
      _
    $region5: #{tpu_custom_call.1} parent=1 // pred_fallthru
      _
    // Predicated region
    $region6: #{tpu_custom_call.1} parent=1 // pred_check
      _
    $region7: #{tpu_custom_call.1} parent=1 // pred_check_branch
      %14 = sbr.rel (0) target = $region9
    $region8: #{tpu_custom_call.1} parent=1 // pred_region
      %s16 = ssub.s32 2048, 2048
      %17 = vsyncadd [#allocation3], %s16
      %s18 = sshll.u32 [#allocation2], 4
      %s19 = int_to_ptr.vmem [resolvable:$true] %s18
      %24 = dma.hbm_to_vmem [thread:$0]  %s1, 2048, %s19, [#allocation3], 128, 128, 8
    $region9: #{tpu_custom_call.1} parent=1 // pred_fallthru
      _
    // Predicated region
    $region10: #{tpu_custom_call.1} parent=1 // pred_check
      _
    $region11: #{tpu_custom_call.1} parent=1 // pred_check_branch
      %26 = sbr.rel (0) target = $region13
    $region12: #{tpu_custom_call.1} parent=1 // pred_region
      _
    $region13: #{tpu_custom_call.1} parent=1 // pred_fallthru
      _
    // Predicated region
    $region14: #{tpu_custom_call.1} parent=1 // pred_check
      _
    $region15: #{tpu_custom_call.1} parent=1 // pred_check_branch
      %28 = sbr.rel (0) target = $region17
    $region16: #{tpu_custom_call.1} parent=1 // pred_region
      _
    $region17: #{tpu_custom_call.1} parent=1 // pred_fallthru
      _
    // Predicated region
    $region18: #{tpu_custom_call.1} parent=1 // pred_check
      _
    $region19: #{tpu_custom_call.1} parent=1 // pred_check_branch
      %30 = sbr.rel (0) target = $region21
    $region20: #{tpu_custom_call.1} parent=1 // pred_region
      %31 = dma.done [#allocation3], 2048
    $region21: #{tpu_custom_call.1} parent=1 // pred_fallthru
      _
    %v33 = vld [vmem:[%s0] sm:$0xff]
    %v34 = vpack.c.bf16 %v33, %v33
    %v35 = vld [vmem:[#allocation2] sm:$0xff]
    %v36 = vld [vmem:[#allocation2 + $0x8] sm:$0xff]
    %v37 = vld [vmem:[#allocation2 + $0x10] sm:$0xff]
    %v38 = vld [vmem:[#allocation2 + $0x18] sm:$0xff]
    %v39 = vld [vmem:[#allocation2 + $0x20] sm:$0xff]
    %v40 = vld [vmem:[#allocation2 + $0x28] sm:$0xff]
    %v41 = vld [vmem:[#allocation2 + $0x30] sm:$0xff]
    %v42 = vld [vmem:[#allocation2 + $0x38] sm:$0xff]
    %v43 = vld [vmem:[#allocation2 + $0x40] sm:$0xff]
    %v44 = vld [vmem:[#allocation2 + $0x48] sm:$0xff]
    %v45 = vld [vmem:[#allocation2 + $0x50] sm:$0xff]
    %v46 = vld [vmem:[#allocation2 + $0x58] sm:$0xff]
    %v47 = vld [vmem:[#allocation2 + $0x60] sm:$0xff]
    %v48 = vld [vmem:[#allocation2 + $0x68] sm:$0xff]
    %v49 = vld [vmem:[#allocation2 + $0x70] sm:$0xff]
    %v50 = vld [vmem:[#allocation2 + $0x78] sm:$0xff]
    %v51 = vpack.c.bf16 %v36, %v35
    %v52 = vpack.c.bf16 %v38, %v37
    %v53 = vpack.c.bf16 %v40, %v39
    %v54 = vpack.c.bf16 %v42, %v41
    %v55 = vpack.c.bf16 %v44, %v43
    %v56 = vpack.c.bf16 %v46, %v45
    %v57 = vpack.c.bf16 %v48, %v47
    %v58 = vpack.c.bf16 %v50, %v49
    %v59 = vld [vmem:[%s2] sm:$0x1]
    %v61 = vlaneseq
    %v62 = vshrl.u32 %v61, 7
    %v63 = vsub.s32 0, %v62
    %v64 = vrot.slane %v59, %v63
    %66 = vmatprep.subr.bf16.mxu0 0
    %67 = vmatpush1.bf16.xpose.msra.mxu0 %v51
    %68 = vmatprep.subr.bf16.mxu0 0
    %69 = vmatpush1.bf16.xpose.msra.mxu0 %v52
    %70 = vmatprep.subr.bf16.mxu0 0
    %71 = vmatpush1.bf16.xpose.msra.mxu0 %v53
    %72 = vmatprep.subr.bf16.mxu0 0
    %73 = vmatpush1.bf16.xpose.msra.mxu0 %v54
    %74 = vmatprep.subr.bf16.mxu0 0
    %75 = vmatpush1.bf16.xpose.msra.mxu0 %v55
    %76 = vmatprep.subr.bf16.mxu0 0
    %77 = vmatpush1.bf16.xpose.msra.mxu0 %v56
    %78 = vmatprep.subr.bf16.mxu0 0
    %79 = vmatpush1.bf16.xpose.msra.mxu0 %v57
    %80 = vmatprep.subr.bf16.mxu0 0
    %81 = vmatpush1.bf16.xpose.msra.mxu0 %v58
    %82 = vmatprep.subr.bf16.mxu0 0
    %83 = vmatpush1.bf16.xpose.msra.mxu0 0
    %84 = vmatprep.subr.bf16.mxu0 0
    %85 = vmatpush1.bf16.xpose.msra.mxu0 0
    %86 = vmatprep.subr.bf16.mxu0 0
    %87 = vmatpush1.bf16.xpose.msra.mxu0 0
    %88 = vmatprep.subr.bf16.mxu0 0
    %89 = vmatpush1.bf16.xpose.msra.mxu0 0
    %90 = vmatprep.subr.bf16.mxu0 0
    %91 = vmatpush1.bf16.xpose.msra.mxu0 0
    %92 = vmatprep.subr.bf16.mxu0 0
    %93 = vmatpush1.bf16.xpose.msra.mxu0 0
    %94 = vmatprep.subr.bf16.mxu0 0
    %95 = vmatpush1.bf16.xpose.msra.mxu0 0
    %96 = vmatprep.subr.bf16.mxu0 0
    %97 = vmatpush1.bf16.xpose.msra.mxu0 0
    %98 = vmatprep.mubr.bf16.mxu0 0
    %99 = vmatmul.mubr.bf16.gmra.mrb[0].mxu0 %v34
    %v100 = vpop.f32.mrb[0].mxu0
    %v101 = vadd.f32 %v64, %v100
    %v102 = vpop.f32.mrb[0].mxu0
    %v103 = vpop.f32.mrb[0].mxu0
    %v104 = vpop.f32.mrb[0].mxu0
    %105 = vdwg.mxu0
    %106 = vmax.xlane.f32.xlu0 %v101
    %v107 = vpop.xlane.xlu0 %106
    %v108 = vsub.f32 %v101, %v107
    %v109 = vmul.f32 %v108, 1.442695
    %v110 = vpow.pop %v109
    %111 = vadd.xlane.f32.xlu0 %v110
    %v112 = vpop.xlane.xlu0 %111
    %v113 = vlaneseq
    %v114 = vand.u32 %v113, 127
    %v115 = vld [vmem:[%s3] sm:$0xff]
    %116 = vset.pattern.permute.xlu0 0
    %117 = vperm.xlu0 %116, %v115
    %v118 = vpop.permute.xlu0 %117
    %vm119 = vcmp.eq.s32.totalorder %v114, %v118
    %v120 = vsel %vm119, 1, 0
    %v121 = vcvt.s32.f32 %v120
    %v122 = vmul.f32 %v108, %v121
    %123 = vadd.xlane.f32.xlu0 %v122
    %v124 = vpop.xlane.xlu0 %123
    %v125 = vlog2.pop %v112
    %v126 = vmul.f32 %v125, 0.6931472
    %v127 = vsub.f32 %v126, %v124
    %v128 = vrot.slane %v127, 4
    %v129 = vadd.f32 %v127, %v128
    %v130 = vrot.slane %v129, 2
    %v131 = vadd.f32 %v129, %v130
    %v132 = vrot.slane %v131, 1
    %v133 = vadd.f32 %v131, %v132
    %134 = vst [vmem:[#allocation5] sm:$0x1] %v133
    // Predicated region
    $region22: #{tpu_custom_call.1} parent=1 // pred_check
      _
    $region23: #{tpu_custom_call.1} parent=1 // pred_check_branch
      %136 = sbr.rel (0) target = $region25
    $region24: #{tpu_custom_call.1} parent=1 // pred_region
      %s138 = ssub.s32 16, 16
      %139 = vsyncadd [#allocation4], %s138
      %s141 = sshll.u32 [#allocation5], 4
      %s142 = int_to_ptr.vmem [resolvable:$true] %s141
      %144 = dma.vmem_to_hbm [thread:$0]  %s142, 16, %s4, [#allocation4]
    $region25: #{tpu_custom_call.1} parent=1 // pred_fallthru
      _
    // Predicated region
    $region26: #{tpu_custom_call.1} parent=1 // pred_check
      _
    $region27: #{tpu_custom_call.1} parent=1 // pred_check_branch
      %146 = sbr.rel (0) target = $region29
    $region28: #{tpu_custom_call.1} parent=1 // pred_region
      %147 = dma.done [#allocation4], 16
    $region29: #{tpu_custom_call.1} parent=1 // pred_fallthru
      _
    %148 = vsyncpa [#allocation3], 1
    %149 = vsyncpa [#allocation4], 1

</llo_original>
